<compile_context>
chip_gen: v7x
topology: tpu7x:2x2x1
jax: 0.10.0
libtpu: 0.0.40
codegen_flags: <defaults>
</compile_context>

<pallas_src>
import jax
import jax.numpy as jnp
from jax.experimental import pallas as pl
from jax.experimental.pallas import tpu as pltpu

_WEIGHT_DTYPE = jnp.bfloat16   # MXU-native path on v6e/v7x; fine on v5e MXU too.


# ----------------------------------------------------------------------------
# Fused kernel: all coupling layers for one batch tile.
#   grid = (batch_tiles, n_flows); flow axis sequential ("arbitrary").
#   z_ref / negs_ref are resident output blocks across the flow axis.
# ----------------------------------------------------------------------------
def _realnvp_fused_kernel(
    x_ref, y_ref, m_ref,
    w1z_ref, w1y_ref, b1_ref, w2_ref, b2_ref, w3_ref, b3_ref,
    z_ref, negs_ref,
):
    f = pl.program_id(1)

    # First flow of this batch tile: seed the resident state.
    @pl.when(f == 0)
    def _init():
        z_ref[...] = x_ref[...]
        negs_ref[...] = jnp.zeros_like(negs_ref)

    D = m_ref.shape[-1]

    z = z_ref[...]                      # (TB, D) f32, resident across flows
    m = m_ref[...]                      # (1, D)  f32, broadcasts over batch
    one_minus_m = 1.0 - m
    z_masked = z * m                    # z_

    # ---- fused s|t MLP: matmuls in bf16 on the MXU, accumulate in f32 -------
    zb = z_masked.astype(w1z_ref.dtype)
    yb = y_ref[...].astype(w1y_ref.dtype)

    h = (jnp.dot(zb, w1z_ref[...], preferred_element_type=jnp.float32)
         + jnp.dot(yb, w1y_ref[...], preferred_element_type=jnp.float32)
         + b1_ref[...])                                              # (TB, 2H)
    h = jnp.maximum(h, 0.0)
    h = (jnp.dot(h.astype(w2_ref.dtype), w2_ref[...],
                 preferred_element_type=jnp.float32) + b2_ref[...])  # (TB, 2H)
    h = jnp.maximum(h, 0.0)
    st = (jnp.dot(h.astype(w3_ref.dtype), w3_ref[...],
                  preferred_element_type=jnp.float32) + b3_ref[...])  # (TB, 2D)

    s = jnp.tanh(st[:, :D]) * one_minus_m        # tanh only on the s half
    t = st[:, D:] * one_minus_m

    # ---- affine coupling update + elementwise log-det contribution ----------
    z_ref[...] = one_minus_m * (z - t) * jnp.exp(-s) + z_masked
    negs_ref[...] = negs_ref[...] - s


def _pick_batch_tile(B, max_tile=256):
    """Batch tile: whole batch if small, else a VMEM-friendly multiple of 8."""
    if B <= max_tile:
        return B
    for t in range(max_tile, 7, -8):   # multiples of 8 only
        if B % t == 0:
            return t
    return B


# ----------------------------------------------------------------------------
# RealNVP.forward — one fused Pallas kernel for the whole flow stack.
# ----------------------------------------------------------------------------
def realnvp_forward(x, y, masks, s_nets, t_nets):
    """Returns (z, log_det_J), matching RealNVP.forward semantics."""
    B, D = x.shape
    Dy = y.shape[1]
    n_flows = int(masks.shape[0])
    H = s_nets[0][0].shape[1]

    # --- fuse the s/t nets of each flow into one wider MLP, then stack -------
    def fuse(sp, tp):
        sW1z, sW1y, sb1, sW2, sb2, sW3, sb3 = sp
        tW1z, tW1y, tb1, tW2, tb2, tW3, tb3 = tp
        zHH = jnp.zeros((H, H), jnp.float32)
        zHD = jnp.zeros((H, D), jnp.float32)
        return (
            jnp.concatenate([sW1z, tW1z], 1).astype(_WEIGHT_DTYPE),    # (D, 2H)
            jnp.concatenate([sW1y, tW1y], 1).astype(_WEIGHT_DTYPE),    # (Dy,2H)
            jnp.concatenate([sb1, tb1], 1),                            # (1, 2H)
            jnp.block([[sW2, zHH], [zHH, tW2]]).astype(_WEIGHT_DTYPE), # (2H,2H)
            jnp.concatenate([sb2, tb2], 1),                            # (1, 2H)
            jnp.block([[sW3, zHD], [zHD, tW3]]).astype(_WEIGHT_DTYPE), # (2H,2D)
            jnp.concatenate([sb3, tb3], 1),                            # (1, 2D)
        )

    fused = [fuse(s_nets[i], t_nets[i]) for i in range(n_flows)]
    stacked = tuple(jnp.stack([fl[k] for fl in fused], 0) for k in range(7))
    masks3 = masks.astype(jnp.float32).reshape(n_flows, 1, D)

    TB = _pick_batch_tile(B)
    grid = (B // TB, n_flows)

    def batch_spec(last):
        return pl.BlockSpec((TB, last), lambda b, f: (b, 0))

    def flow_spec(arr):
        nd = arr.ndim
        # Leading flow dim squeezed; walked in reverse (forward() order).
        return pl.BlockSpec(
            (None,) + tuple(arr.shape[1:]),
            lambda b, f, nd=nd: (n_flows - 1 - f,) + (0,) * (nd - 1))

    in_specs = ([batch_spec(D), batch_spec(Dy), flow_spec(masks3)]
                + [flow_spec(a) for a in stacked])
    out_specs = (batch_spec(D), batch_spec(D))

    z, neg_s = pl.pallas_call(
        _realnvp_fused_kernel,
        grid=grid,
        in_specs=in_specs,
        out_specs=out_specs,
        out_shape=(
            jax.ShapeDtypeStruct((B, D), jnp.float32),
            jax.ShapeDtypeStruct((B, D), jnp.float32),
        ),
        compiler_params=pltpu.CompilerParams(
            dimension_semantics=("parallel", "arbitrary")),
    )(x, y, masks3, *stacked)

    # One row-reduce for the whole network (kept out of the per-flow loop).
    # TODO(synk): for realistic D, pad D (z / neg_s last dim) to a multiple of
    # 128 lanes to avoid masked partial stores.
    log_det_J = jnp.sum(neg_s, axis=1)
    return z, log_det_J


# ----------------------------------------------------------------------------
# Deterministic parameter construction (synthetic weights, PyTorch-free).
# Weights are stored (in, out); W1 is pre-split into its z- and y- blocks.
# ----------------------------------------------------------------------------
def make_net_params(key, D, Dy, H, scale=0.1):
    ks = jax.random.split(key, 6)
    W1 = scale * jax.random.normal(ks[0], (D + Dy, H), jnp.float32)
    b1 = scale * jax.random.normal(ks[1], (1, H), jnp.float32)
    W2 = scale * jax.random.normal(ks[2], (H, H), jnp.float32)
    b2 = scale * jax.random.normal(ks[3], (1, H), jnp.float32)
    W3 = scale * jax.random.normal(ks[4], (H, D), jnp.float32)
    b3 = scale * jax.random.normal(ks[5], (1, D), jnp.float32)
    return (W1[:D], W1[D:], b1, W2, b2, W3, b3)


def make_masks(n_flows, D):
    j = jnp.arange(D)
    rows = [((j + i) % 2).astype(jnp.float32) for i in range(n_flows)]
    return jnp.stack(rows, axis=0)


# ----------------------------------------------------------------------------
# Pure-JAX references for correctness checking.
#   matmul_dtype=jnp.float32  -> mirrors the PyTorch module exactly.
#   matmul_dtype=jnp.bfloat16 -> mirrors the kernel's bf16-matmul numerics.
# ----------------------------------------------------------------------------
def _mlp_ref(params, z_masked, y, final_tanh, matmul_dtype):
    W1z, W1y, b1, W2, b2, W3, b3 = params

    def mm(a, w):
        return jnp.dot(a.astype(matmul_dtype), w.astype(matmul_dtype),
                       preferred_element_type=jnp.float32)

    h = mm(z_masked, W1z) + mm(y, W1y) + b1
    h = jnp.maximum(h, 0.0)
    h = jnp.maximum(mm(h, W2) + b2, 0.0)
    out = mm(h, W3) + b3
    return jnp.tanh(out) if final_tanh else out


def realnvp_forward_ref(x, y, masks, s_nets, t_nets, matmul_dtype=jnp.float32):
    B = x.shape[0]
    z = x
    log_det_J = jnp.zeros((B,), jnp.float32)
    for i in reversed(range(masks.shape[0])):
        m = masks[i:i + 1]
        z_ = m * z
        s = _mlp_ref(s_nets[i], z_, y, True, matmul_dtype) * (1.0 - m)
        t = _mlp_ref(t_nets[i], z_, y, False, matmul_dtype) * (1.0 - m)
        z = (1.0 - m) * (z - t) * jnp.exp(-s) + z_
        log_det_J = log_det_J - jnp.sum(s, axis=1)
    return z, log_det_J


if __name__ == "__main__":
    B, D, Dy, H, N_FLOWS = 8, 8, 4, 32, 4

    root = jax.random.PRNGKey(0)
    kx, ky, kp = jax.random.split(root, 3)
    x = jax.random.normal(kx, (B, D), jnp.float32)
    y = jax.random.normal(ky, (B, Dy), jnp.float32)

    masks = make_masks(N_FLOWS, D)
    net_keys = jax.random.split(kp, 2 * N_FLOWS)
    s_nets = [make_net_params(net_keys[i], D, Dy, H) for i in range(N_FLOWS)]
    t_nets = [make_net_params(net_keys[N_FLOWS + i], D, Dy, H)
              for i in range(N_FLOWS)]

    fwd = jax.jit(realnvp_forward)
    z, ldj = fwd(x, y, masks, s_nets, t_nets)
    z = jax.block_until_ready(z)
    ldj = jax.block_until_ready(ldj)

    # 1) Kernel-logic check: reference using the same bf16-matmul / f32-
    #    elementwise numerics as the kernel -> tight tolerance.
    z_bf, ldj_bf = realnvp_forward_ref(x, y, masks, s_nets, t_nets,
                                       matmul_dtype=jnp.bfloat16)
    assert jnp.allclose(z, z_bf, atol=1e-4, rtol=1e-4), "z mismatch (bf16 ref)"
    assert jnp.allclose(ldj, ldj_bf, atol=1e-4, rtol=1e-4), "ldj mismatch (bf16 ref)"

    # 2) Module-semantics check: full-f32 reference (difference is only the
    #    bf16 rounding of the matmul inputs) -> loose tolerance.
    z_f32, ldj_f32 = realnvp_forward_ref(x, y, masks, s_nets, t_nets,
                                         matmul_dtype=jnp.float32)
    assert jnp.allclose(z, z_f32, atol=5e-2, rtol=5e-2), "z mismatch (f32 ref)"
    assert jnp.allclose(ldj, ldj_f32, atol=5e-2, rtol=5e-2), "ldj mismatch (f32 ref)"

    print("KERNEL_OK")
</pallas_src>

<mosaic_0001>
module attributes {stable_mosaic.version = 11 : i64} {
  func.func @_realnvp_fused_kernel(%arg0: i32, %arg1: i32, %arg2: memref<8x8xf32, #tpu.memory_space<vmem>>, %arg3: memref<8x4xf32, #tpu.memory_space<vmem>>, %arg4: memref<1x1x8xf32, #tpu.memory_space<vmem>>, %arg5: memref<1x8x64xbf16, #tpu.memory_space<vmem>>, %arg6: memref<1x4x64xbf16, #tpu.memory_space<vmem>>, %arg7: memref<1x1x64xf32, #tpu.memory_space<vmem>>, %arg8: memref<1x64x64xbf16, #tpu.memory_space<vmem>>, %arg9: memref<1x1x64xf32, #tpu.memory_space<vmem>>, %arg10: memref<1x64x16xbf16, #tpu.memory_space<vmem>>, %arg11: memref<1x1x16xf32, #tpu.memory_space<vmem>>, %arg12: memref<8x8xf32, #tpu.memory_space<vmem>>, %arg13: memref<8x8xf32, #tpu.memory_space<vmem>>) attributes {dimension_semantics = [#tpu.dimension_semantics<parallel>, #tpu.dimension_semantics<arbitrary>], iteration_bounds = array<i64: 1, 4>, scalar_prefetch = 0 : i64, scratch_operands = 0 : i64, tpu.core_type = #tpu.core_type<tc>, window_params = [{transform_indices = @transform_0, window_bounds = array<i64: 8, 8>}, {transform_indices = @transform_1, window_bounds = array<i64: 8, 4>}, {transform_indices = @transform_2, window_bounds = array<i64: 1, 1, 8>}, {transform_indices = @transform_3, window_bounds = array<i64: 1, 8, 64>}, {transform_indices = @transform_4, window_bounds = array<i64: 1, 4, 64>}, {transform_indices = @transform_5, window_bounds = array<i64: 1, 1, 64>}, {transform_indices = @transform_6, window_bounds = array<i64: 1, 64, 64>}, {transform_indices = @transform_7, window_bounds = array<i64: 1, 1, 64>}, {transform_indices = @transform_8, window_bounds = array<i64: 1, 64, 16>}, {transform_indices = @transform_9, window_bounds = array<i64: 1, 1, 16>}, {transform_indices = @transform_10, window_bounds = array<i64: 8, 8>}, {transform_indices = @transform_11, window_bounds = array<i64: 8, 8>}]} {
    %c0_i32 = arith.constant 0 : i32
    %0 = arith.cmpi eq, %arg1, %c0_i32 : i32
    %1 = arith.extui %0 : i1 to i32
    %c0_i32_0 = arith.constant 0 : i32
    %2 = arith.cmpi ne, %1, %c0_i32_0 : i32
    scf.if %2 {
      %c0_41 = arith.constant 0 : index
      %c0_42 = arith.constant 0 : index
      %63 = vector.load %arg2[%c0_41, %c0_42] : memref<8x8xf32, #tpu.memory_space<vmem>>, vector<8x8xf32>
      %c0_43 = arith.constant 0 : index
      %c0_44 = arith.constant 0 : index
      %64 = vector.load %arg12[%c0_43, %c0_44] : memref<8x8xf32, #tpu.memory_space<vmem>>, vector<8x8xf32>
      tpu.vector_store %arg12[%c0_43, %c0_44], %63 {strides = array<i32>} : memref<8x8xf32, #tpu.memory_space<vmem>>, vector<8x8xf32>,
      %cst_45 = arith.constant 0.000000e+00 : f32
      %65 = vector.broadcast %cst_45 : f32 to vector<8x8xf32>
      %c0_46 = arith.constant 0 : index
      %c0_47 = arith.constant 0 : index
      %66 = vector.load %arg13[%c0_46, %c0_47] : memref<8x8xf32, #tpu.memory_space<vmem>>, vector<8x8xf32>
      tpu.vector_store %arg13[%c0_46, %c0_47], %65 {strides = array<i32>} : memref<8x8xf32, #tpu.memory_space<vmem>>, vector<8x8xf32>,
    } else {
    }
    %c0 = arith.constant 0 : index
    %c0_1 = arith.constant 0 : index
    %3 = vector.load %arg12[%c0, %c0_1] : memref<8x8xf32, #tpu.memory_space<vmem>>, vector<8x8xf32>
    %c0_2 = arith.constant 0 : index
    %c0_3 = arith.constant 0 : index
    %c0_4 = arith.constant 0 : index
    %4 = vector.load %arg4[%c0_2, %c0_3, %c0_4] : memref<1x1x8xf32, #tpu.memory_space<vmem>>, vector<1x1x8xf32>
    %5 = vector.shape_cast %4 : vector<1x1x8xf32> to vector<1x8xf32>
    %cst = arith.constant 1.000000e+00 : f32
    %6 = vector.broadcast %cst : f32 to vector<1x8xf32>
    %7 = arith.subf %6, %5 : vector<1x8xf32>
    %8 = vector.broadcast %5 : vector<1x8xf32> to vector<8x8xf32>
    %9 = arith.mulf %3, %8 : vector<8x8xf32>
    %10 = arith.truncf %9 : vector<8x8xf32> to vector<8x8xbf16>
    %c0_5 = arith.constant 0 : index
    %c0_6 = arith.constant 0 : index
    %11 = vector.load %arg3[%c0_5, %c0_6] : memref<8x4xf32, #tpu.memory_space<vmem>>, vector<8x4xf32>
    %12 = arith.truncf %11 : vector<8x4xf32> to vector<8x4xbf16>
    %c0_7 = arith.constant 0 : index
    %c0_8 = arith.constant 0 : index
    %c0_9 = arith.constant 0 : index
    %13 = vector.load %arg5[%c0_7, %c0_8, %c0_9] : memref<1x8x64xbf16, #tpu.memory_space<vmem>>, vector<1x8x64xbf16>
    %14 = vector.shape_cast %13 : vector<1x8x64xbf16> to vector<8x64xbf16>
    %cst_10 = arith.constant dense<0.000000e+00> : vector<8x64xf32>
    %15 = tpu.matmul %10, %14, %cst_10 {dimension_numbers = #tpu.dot_dimension_numbers<[1], [0], [0], [1], [0, 0, 1, 1], [], []>} : vector<8x8xbf16>, vector<8x64xbf16>, vector<8x64xf32> -> vector<8x64xf32>
    %c0_11 = arith.constant 0 : index
    %c0_12 = arith.constant 0 : index
    %c0_13 = arith.constant 0 : index
    %16 = vector.load %arg6[%c0_11, %c0_12, %c0_13] : memref<1x4x64xbf16, #tpu.memory_space<vmem>>, vector<1x4x64xbf16>
    %17 = vector.shape_cast %16 : vector<1x4x64xbf16> to vector<4x64xbf16>
    %cst_14 = arith.constant dense<0.000000e+00> : vector<8x64xf32>
    %18 = tpu.matmul %12, %17, %cst_14 {dimension_numbers = #tpu.dot_dimension_numbers<[1], [0], [0], [1], [0, 0, 1, 1], [], []>} : vector<8x4xbf16>, vector<4x64xbf16>, vector<8x64xf32> -> vector<8x64xf32>
    %19 = arith.addf %15, %18 : vector<8x64xf32>
    %c0_15 = arith.constant 0 : index
    %c0_16 = arith.constant 0 : index
    %c0_17 = arith.constant 0 : index
    %20 = vector.load %arg7[%c0_15, %c0_16, %c0_17] : memref<1x1x64xf32, #tpu.memory_space<vmem>>, vector<1x1x64xf32>
    %21 = vector.shape_cast %20 : vector<1x1x64xf32> to vector<1x64xf32>
    %22 = vector.broadcast %21 : vector<1x64xf32> to vector<8x64xf32>
    %23 = arith.addf %19, %22 : vector<8x64xf32>
    %cst_18 = arith.constant 0.000000e+00 : f32
    %24 = vector.broadcast %cst_18 : f32 to vector<8x64xf32>
    %25 = arith.maximumf %23, %24 : vector<8x64xf32>
    %26 = arith.truncf %25 : vector<8x64xf32> to vector<8x64xbf16>
    %c0_19 = arith.constant 0 : index
    %c0_20 = arith.constant 0 : index
    %c0_21 = arith.constant 0 : index
    %27 = vector.load %arg8[%c0_19, %c0_20, %c0_21] : memref<1x64x64xbf16, #tpu.memory_space<vmem>>, vector<1x64x64xbf16>
    %28 = vector.shape_cast %27 : vector<1x64x64xbf16> to vector<64x64xbf16>
    %cst_22 = arith.constant dense<0.000000e+00> : vector<8x64xf32>
    %29 = tpu.matmul %26, %28, %cst_22 {dimension_numbers = #tpu.dot_dimension_numbers<[1], [0], [0], [1], [0, 0, 1, 1], [], []>} : vector<8x64xbf16>, vector<64x64xbf16>, vector<8x64xf32> -> vector<8x64xf32>
    %c0_23 = arith.constant 0 : index
    %c0_24 = arith.constant 0 : index
    %c0_25 = arith.constant 0 : index
    %30 = vector.load %arg9[%c0_23, %c0_24, %c0_25] : memref<1x1x64xf32, #tpu.memory_space<vmem>>, vector<1x1x64xf32>
    %31 = vector.shape_cast %30 : vector<1x1x64xf32> to vector<1x64xf32>
    %32 = vector.broadcast %31 : vector<1x64xf32> to vector<8x64xf32>
    %33 = arith.addf %29, %32 : vector<8x64xf32>
    %cst_26 = arith.constant 0.000000e+00 : f32
    %34 = vector.broadcast %cst_26 : f32 to vector<8x64xf32>
    %35 = arith.maximumf %33, %34 : vector<8x64xf32>
    %36 = arith.truncf %35 : vector<8x64xf32> to vector<8x64xbf16>
    %c0_27 = arith.constant 0 : index
    %c0_28 = arith.constant 0 : index
    %c0_29 = arith.constant 0 : index
    %37 = vector.load %arg10[%c0_27, %c0_28, %c0_29] : memref<1x64x16xbf16, #tpu.memory_space<vmem>>, vector<1x64x16xbf16>
    %38 = vector.shape_cast %37 : vector<1x64x16xbf16> to vector<64x16xbf16>
    %cst_30 = arith.constant dense<0.000000e+00> : vector<8x16xf32>
    %39 = tpu.matmul %36, %38, %cst_30 {dimension_numbers = #tpu.dot_dimension_numbers<[1], [0], [0], [1], [0, 0, 1, 1], [], []>} : vector<8x64xbf16>, vector<64x16xbf16>, vector<8x16xf32> -> vector<8x16xf32>
    %c0_31 = arith.constant 0 : index
    %c0_32 = arith.constant 0 : index
    %c0_33 = arith.constant 0 : index
    %40 = vector.load %arg11[%c0_31, %c0_32, %c0_33] : memref<1x1x16xf32, #tpu.memory_space<vmem>>, vector<1x1x16xf32>
    %41 = vector.shape_cast %40 : vector<1x1x16xf32> to vector<1x16xf32>
    %42 = vector.broadcast %41 : vector<1x16xf32> to vector<8x16xf32>
    %43 = arith.addf %39, %42 : vector<8x16xf32>
    %44 = vector.extract_strided_slice %43 {offsets = [0, 0], sizes = [8, 8], strides = [1, 1]} : vector<8x16xf32> to vector<8x8xf32>
    %45 = math.tanh %44 : vector<8x8xf32>
    %46 = vector.broadcast %7 : vector<1x8xf32> to vector<8x8xf32>
    %47 = arith.mulf %45, %46 : vector<8x8xf32>
    %48 = vector.extract_strided_slice %43 {offsets = [0, 8], sizes = [8, 8], strides = [1, 1]} : vector<8x16xf32> to vector<8x8xf32>
    %49 = vector.broadcast %7 : vector<1x8xf32> to vector<8x8xf32>
    %50 = arith.mulf %48, %49 : vector<8x8xf32>
    %51 = arith.subf %3, %50 : vector<8x8xf32>
    %52 = vector.broadcast %7 : vector<1x8xf32> to vector<8x8xf32>
    %53 = arith.mulf %52, %51 : vector<8x8xf32>
    %cst_34 = arith.constant 0.000000e+00 : f32
    %54 = vector.broadcast %cst_34 : f32 to vector<8x8xf32>
    %55 = arith.subf %54, %47 : vector<8x8xf32>
    %56 = math.exp %55 : vector<8x8xf32>
    %57 = arith.mulf %53, %56 : vector<8x8xf32>
    %58 = arith.addf %57, %9 : vector<8x8xf32>
    %c0_35 = arith.constant 0 : index
    %c0_36 = arith.constant 0 : index
    %59 = vector.load %arg12[%c0_35, %c0_36] : memref<8x8xf32, #tpu.memory_space<vmem>>, vector<8x8xf32>
    tpu.vector_store %arg12[%c0_35, %c0_36], %58 {strides = array<i32>} : memref<8x8xf32, #tpu.memory_space<vmem>>, vector<8x8xf32>,
    %c0_37 = arith.constant 0 : index
    %c0_38 = arith.constant 0 : index
    %60 = vector.load %arg13[%c0_37, %c0_38] : memref<8x8xf32, #tpu.memory_space<vmem>>, vector<8x8xf32>
    %61 = arith.subf %60, %47 : vector<8x8xf32>
    %c0_39 = arith.constant 0 : index
    %c0_40 = arith.constant 0 : index
    %62 = vector.load %arg13[%c0_39, %c0_40] : memref<8x8xf32, #tpu.memory_space<vmem>>, vector<8x8xf32>
    tpu.vector_store %arg13[%c0_39, %c0_40], %61 {strides = array<i32>} : memref<8x8xf32, #tpu.memory_space<vmem>>, vector<8x8xf32>,
    return
  }
  func.func @transform_0(%arg0: i32, %arg1: i32) -> (i32, i32) {
    %c0_i32 = arith.constant 0 : i32
    %c0_i32_0 = arith.constant 0 : i32
    return %arg0, %c0_i32 : i32, i32
  }
  func.func @transform_1(%arg0: i32, %arg1: i32) -> (i32, i32) {
    %c0_i32 = arith.constant 0 : i32
    %c0_i32_0 = arith.constant 0 : i32
    return %arg0, %c0_i32 : i32, i32
  }
  func.func @transform_2(%arg0: i32, %arg1: i32) -> (i32, i32, i32) {
    %c3_i32 = arith.constant 3 : i32
    %0 = arith.subi %c3_i32, %arg1 : i32
    %c0_i32 = arith.constant 0 : i32
    %c0_i32_0 = arith.constant 0 : i32
    %c0_i32_1 = arith.constant 0 : i32
    return %0, %c0_i32, %c0_i32_0 : i32, i32, i32
  }
  func.func @transform_3(%arg0: i32, %arg1: i32) -> (i32, i32, i32) {
    %c3_i32 = arith.constant 3 : i32
    %0 = arith.subi %c3_i32, %arg1 : i32
    %c0_i32 = arith.constant 0 : i32
    %c0_i32_0 = arith.constant 0 : i32
    %c0_i32_1 = arith.constant 0 : i32
    return %0, %c0_i32, %c0_i32_0 : i32, i32, i32
  }
  func.func @transform_4(%arg0: i32, %arg1: i32) -> (i32, i32, i32) {
    %c3_i32 = arith.constant 3 : i32
    %0 = arith.subi %c3_i32, %arg1 : i32
    %c0_i32 = arith.constant 0 : i32
    %c0_i32_0 = arith.constant 0 : i32
    %c0_i32_1 = arith.constant 0 : i32
    return %0, %c0_i32, %c0_i32_0 : i32, i32, i32
  }
  func.func @transform_5(%arg0: i32, %arg1: i32) -> (i32, i32, i32) {
    %c3_i32 = arith.constant 3 : i32
    %0 = arith.subi %c3_i32, %arg1 : i32
    %c0_i32 = arith.constant 0 : i32
    %c0_i32_0 = arith.constant 0 : i32
    %c0_i32_1 = arith.constant 0 : i32
    return %0, %c0_i32, %c0_i32_0 : i32, i32, i32
  }
  func.func @transform_6(%arg0: i32, %arg1: i32) -> (i32, i32, i32) {
    %c3_i32 = arith.constant 3 : i32
    %0 = arith.subi %c3_i32, %arg1 : i32
    %c0_i32 = arith.constant 0 : i32
    %c0_i32_0 = arith.constant 0 : i32
    %c0_i32_1 = arith.constant 0 : i32
    return %0, %c0_i32, %c0_i32_0 : i32, i32, i32
  }
  func.func @transform_7(%arg0: i32, %arg1: i32) -> (i32, i32, i32) {
    %c3_i32 = arith.constant 3 : i32
    %0 = arith.subi %c3_i32, %arg1 : i32
    %c0_i32 = arith.constant 0 : i32
    %c0_i32_0 = arith.constant 0 : i32
    %c0_i32_1 = arith.constant 0 : i32
    return %0, %c0_i32, %c0_i32_0 : i32, i32, i32
  }
  func.func @transform_8(%arg0: i32, %arg1: i32) -> (i32, i32, i32) {
    %c3_i32 = arith.constant 3 : i32
    %0 = arith.subi %c3_i32, %arg1 : i32
    %c0_i32 = arith.constant 0 : i32
    %c0_i32_0 = arith.constant 0 : i32
    %c0_i32_1 = arith.constant 0 : i32
    return %0, %c0_i32, %c0_i32_0 : i32, i32, i32
  }
  func.func @transform_9(%arg0: i32, %arg1: i32) -> (i32, i32, i32) {
    %c3_i32 = arith.constant 3 : i32
    %0 = arith.subi %c3_i32, %arg1 : i32
    %c0_i32 = arith.constant 0 : i32
    %c0_i32_0 = arith.constant 0 : i32
    %c0_i32_1 = arith.constant 0 : i32
    return %0, %c0_i32, %c0_i32_0 : i32, i32, i32
  }
  func.func @transform_10(%arg0: i32, %arg1: i32) -> (i32, i32) {
    %c0_i32 = arith.constant 0 : i32
    %c0_i32_0 = arith.constant 0 : i32
    return %arg0, %c0_i32 : i32, i32
  }
  func.func @transform_11(%arg0: i32, %arg1: i32) -> (i32, i32) {
    %c0_i32 = arith.constant 0 : i32
    %c0_i32_0 = arith.constant 0 : i32
    return %arg0, %c0_i32 : i32, i32
  }
}

</mosaic_0001>

<llo_original>
// kernel: realnvp_forward.1
$region0: #{realnvp_forward.1}
  #allocation0 [shape = 'u32[]', space=smem, size = 0x4, offset = 0x4, fixed_abs, tag = 'smem constant byte address 0x4 - core index']
  #allocation1 [shape = 'u32[144,128]{1,0:T(1,128)}', space=vmem, size = 0x12000, scoped, tag = 'internal scratch']
  %s0 = inlined_call_operand.vmem [shape: f32[8,8], index: 0, kind: input, shape index: {}]
  %s1 = inlined_call_operand.vmem [shape: f32[8,4], index: 1, kind: input, shape index: {}]
  %s2 = inlined_call_operand.vmem [shape: f32[4,1,8], index: 2, kind: input, shape index: {}]
  %s3 = inlined_call_operand.vmem [shape: bf16[4,8,64], index: 3, kind: input, shape index: {}]
  %s4 = inlined_call_operand.vmem [shape: bf16[4,4,64], index: 4, kind: input, shape index: {}]
  %s5 = inlined_call_operand.vmem [shape: f32[4,1,64], index: 5, kind: input, shape index: {}]
  %s6 = inlined_call_operand.vmem [shape: bf16[4,64,64], index: 6, kind: input, shape index: {}]
  %s7 = inlined_call_operand.vmem [shape: f32[4,1,64], index: 7, kind: input, shape index: {}]
  %s8 = inlined_call_operand.vmem [shape: bf16[4,64,16], index: 8, kind: input, shape index: {}]
  %s9 = inlined_call_operand.vmem [shape: f32[4,1,16], index: 9, kind: input, shape index: {}]
  %s10 = inlined_call_operand.hbm [shape: f32[8,8], index: 10, kind: output, shape index: {0}]
  %s11 = inlined_call_operand.vmem [shape: f32[8,8], index: 11, kind: output, shape index: {1}]
  %12 = xla_tuple %s10, %s11
  %s13 = sld [smem:[#allocation0]]
  $region85: #{realnvp_forward.1} parent=0
    _
  %s15 = ssub.s32 1, %s13
  %s16 = scalar_select 0, %s15, %s13
  $region1: #{realnvp_forward.1} parent=0
    #allocation2 [shape = 'u8[4096]{0}', space=vmem, size = 0x1000, scoped, tag = 'output window, operand 0, single buffered']
    #allocation3 [shape = 's32[2]{0}', space=sflag, size = 0x8, scoped, tag = 'scoped memory for realnvp_forward.1']
    %17 = vsyncpa [#allocation3], 0
    loop: start=0, step=1, limit=6
    $region2: #{realnvp_forward.1} parent=1 // loop_pre_header
      _
    $region3: #{realnvp_forward.1} parent=1 // loop_header
      %s19 = sphi 0, %s23
      %p20 = scmp.ge.s32.totalorder %s19, 6
      %s26 = sphi 0, %s38
      %s27 = sphi 0, %s34
      %s28 = sphi 0, %s26
      %s29 = sphi 0, %s27
      %s30 = sphi 0, %s28
      %s31 = sphi 0, %s29
      %s41 = sphi 0, %s43
      %s44 = sphi 0, %s41
      %s45 = sphi 0, %s44
      %s61 = sphi 0, %s45
      %s67 = sphi 0, %s69
      %s70 = sphi 0, %s67
      %s71 = sphi 0, %s70
      %s87 = sphi 0, %s71
      %s95 = sphi 0, %s97
      %s98 = sphi 0, %s95
      %s99 = sphi 0, %s98
      %s115 = sphi 0, %s99
      %s123 = sphi 0, %s125
      %s126 = sphi 0, %s123
      %s127 = sphi 0, %s126
      %s143 = sphi 0, %s127
      %s151 = sphi 0, %s153
      %s154 = sphi 0, %s151
      %s155 = sphi 0, %s154
      %s171 = sphi 0, %s155
      %s179 = sphi 0, %s181
      %s182 = sphi 0, %s179
      %s183 = sphi 0, %s182
      %s199 = sphi 0, %s183
      %s207 = sphi 0, %s209
      %s210 = sphi 0, %s207
      %s211 = sphi 0, %s210
      %s227 = sphi 0, %s211
      %s235 = sphi 0, %s237
      %s238 = sphi 0, %s235
      %s239 = sphi 0, %s238
      %s255 = sphi 0, %s239
      %s263 = sphi 0, %s265
      %s266 = sphi 0, %s263
      %s267 = sphi 0, %s266
      %s283 = sphi 0, %s267
      %s291 = sphi 0, %s293
      %s294 = sphi 0, %s291
      %s295 = sphi 0, %s294
      %s311 = sphi 0, %s295
      %s317 = sphi 0, %s319
      %s320 = sphi 0, %s317
      %s321 = sphi 0, %s320
      %s337 = sphi 0, %s321
      %s343 = sphi 0, %s345
      %s346 = sphi 0, %s343
      %s347 = sphi 0, %s346
      %s363 = sphi 0, %s347
    $region4: #{realnvp_forward.1} parent=1 // loop_header_branch
      %22 = sbr.rel (%p20) target = $region8
    $region5: #{realnvp_forward.1} parent=1 // loop_body
      %s24 = ssub.s32 %s19, 1
      %s25 = ssub.s32 %s19, 2
      %s32 = sadd.s32 1, %s27
      %p33 = scmp.ge.s32.totalorder %s32, 4
      %s34 = scalar_select %p33, 0, %s32
      %s35 = sadd.s32 1, %s26
      %s36 = scalar_select %p33, %s35, %s26
      %p37 = scmp.ge.s32.totalorder %s36, 1
      %s38 = scalar_select %p37, 0, %s36
      %s39 = ssub.s32 %s26, %s38
      %p40 = scmp.eq.s32.totalorder %s39, 0
      %s42 = sadd.s32 %s41, 1
      %s43 = scalar_select %p40, %s41, %s42
      %p46 = pneg %p40
      %p47 = scmp.eq.s32.totalorder %s19, 3
      %p48 = por %p46, %p47
      %p49 = scmp.ne.s32.totalorder %s41, %s44
      %p50 = scmp.eq.s32.totalorder %s19, 0
      %p51 = por %p49, %p50
      %p52 = scmp.ne.s32.totalorder %s41, %s44
      %p53 = scmp.eq.s32.totalorder %s24, 3
      %p54 = por %p52, %p53
      %p55 = scmp.ne.s32.totalorder %s44, %s45
      %p56 = scmp.eq.s32.totalorder %s24, 0
      %p57 = por %p55, %p56
      %p58 = scmp.ne.s32.totalorder %s44, %s45
      %p59 = scmp.eq.s32.totalorder %s25, 3
      %p60 = por %p58, %p59
      %p62 = scmp.ne.s32.totalorder %s45, %s61
      %p63 = scmp.eq.s32.totalorder %s25, 0
      %p64 = por %p62, %p63
      %s65 = ssub.s32 %s26, %s38
      %p66 = scmp.eq.s32.totalorder %s65, 0
      %s68 = sadd.s32 %s67, 1
      %s69 = scalar_select %p66, %s67, %s68
      %p72 = pneg %p66
      %p73 = scmp.eq.s32.totalorder %s19, 3
      %p74 = por %p72, %p73
      %p75 = scmp.ne.s32.totalorder %s67, %s70
      %p76 = scmp.eq.s32.totalorder %s19, 0
      %p77 = por %p75, %p76
      %p78 = scmp.ne.s32.totalorder %s67, %s70
      %p79 = scmp.eq.s32.totalorder %s24, 3
      %p80 = por %p78, %p79
      %p81 = scmp.ne.s32.totalorder %s70, %s71
      %p82 = scmp.eq.s32.totalorder %s24, 0
      %p83 = por %p81, %p82
      %p84 = scmp.ne.s32.totalorder %s70, %s71
      %p85 = scmp.eq.s32.totalorder %s25, 3
      %p86 = por %p84, %p85
      %p88 = scmp.ne.s32.totalorder %s71, %s87
      %p89 = scmp.eq.s32.totalorder %s25, 0
      %p90 = por %p88, %p89
      %s91 = ssub.s32 3, %s27
      %s92 = ssub.s32 3, %s34
      %s93 = ssub.s32 %s91, %s92
      %p94 = scmp.eq.s32.totalorder %s93, 0
      %s96 = sadd.s32 %s95, 1
      %s97 = scalar_select %p94, %s95, %s96
      %p100 = pneg %p94
      %p101 = scmp.eq.s32.totalorder %s19, 3
      %p102 = por %p100, %p101
      %p103 = scmp.ne.s32.totalorder %s95, %s98
      %p104 = scmp.eq.s32.totalorder %s19, 0
      %p105 = por %p103, %p104
      %p106 = scmp.ne.s32.totalorder %s95, %s98
      %p107 = scmp.eq.s32.totalorder %s24, 3
      %p108 = por %p106, %p107
      %p109 = scmp.ne.s32.totalorder %s98, %s99
      %p110 = scmp.eq.s32.totalorder %s24, 0
      %p111 = por %p109, %p110
      %p112 = scmp.ne.s32.totalorder %s98, %s99
      %p113 = scmp.eq.s32.totalorder %s25, 3
      %p114 = por %p112, %p113
      %p116 = scmp.ne.s32.totalorder %s99, %s115
      %p117 = scmp.eq.s32.totalorder %s25, 0
      %p118 = por %p116, %p117
      %s119 = ssub.s32 3, %s27
      %s120 = ssub.s32 3, %s34
      %s121 = ssub.s32 %s119, %s120
      %p122 = scmp.eq.s32.totalorder %s121, 0
      %s124 = sadd.s32 %s123, 1
      %s125 = scalar_select %p122, %s123, %s124
      %p128 = pneg %p122
      %p129 = scmp.eq.s32.totalorder %s19, 3
      %p130 = por %p128, %p129
      %p131 = scmp.ne.s32.totalorder %s123, %s126
      %p132 = scmp.eq.s32.totalorder %s19, 0
      %p133 = por %p131, %p132
      %p134 = scmp.ne.s32.totalorder %s123, %s126
      %p135 = scmp.eq.s32.totalorder %s24, 3
      %p136 = por %p134, %p135
      %p137 = scmp.ne.s32.totalorder %s126, %s127
      %p138 = scmp.eq.s32.totalorder %s24, 0
      %p139 = por %p137, %p138
      %p140 = scmp.ne.s32.totalorder %s126, %s127
      %p141 = scmp.eq.s32.totalorder %s25, 3
      %p142 = por %p140, %p141
      %p144 = scmp.ne.s32.totalorder %s127, %s143
      %p145 = scmp.eq.s32.totalorder %s25, 0
      %p146 = por %p144, %p145
      %s147 = ssub.s32 3, %s27
      %s148 = ssub.s32 3, %s34
      %s149 = ssub.s32 %s147, %s148
      %p150 = scmp.eq.s32.totalorder %s149, 0
      %s152 = sadd.s32 %s151, 1
      %s153 = scalar_select %p150, %s151, %s152
      %p156 = pneg %p150
      %p157 = scmp.eq.s32.totalorder %s19, 3
      %p158 = por %p156, %p157
      %p159 = scmp.ne.s32.totalorder %s151, %s154
      %p160 = scmp.eq.s32.totalorder %s19, 0
      %p161 = por %p159, %p160
      %p162 = scmp.ne.s32.totalorder %s151, %s154
      %p163 = scmp.eq.s32.totalorder %s24, 3
      %p164 = por %p162, %p163
      %p165 = scmp.ne.s32.totalorder %s154, %s155
      %p166 = scmp.eq.s32.totalorder %s24, 0
      %p167 = por %p165, %p166
      %p168 = scmp.ne.s32.totalorder %s154, %s155
      %p169 = scmp.eq.s32.totalorder %s25, 3
      %p170 = por %p168, %p169
      %p172 = scmp.ne.s32.totalorder %s155, %s171
      %p173 = scmp.eq.s32.totalorder %s25, 0
      %p174 = por %p172, %p173
      %s175 = ssub.s32 3, %s27
      %s176 = ssub.s32 3, %s34
      %s177 = ssub.s32 %s175, %s176
      %p178 = scmp.eq.s32.totalorder %s177, 0
      %s180 = sadd.s32 %s179, 1
      %s181 = scalar_select %p178, %s179, %s180
      %p184 = pneg %p178
      %p185 = scmp.eq.s32.totalorder %s19, 3
      %p186 = por %p184, %p185
      %p187 = scmp.ne.s32.totalorder %s179, %s182
      %p188 = scmp.eq.s32.totalorder %s19, 0
      %p189 = por %p187, %p188
      %p190 = scmp.ne.s32.totalorder %s179, %s182
      %p191 = scmp.eq.s32.totalorder %s24, 3
      %p192 = por %p190, %p191
      %p193 = scmp.ne.s32.totalorder %s182, %s183
      %p194 = scmp.eq.s32.totalorder %s24, 0
      %p195 = por %p193, %p194
      %p196 = scmp.ne.s32.totalorder %s182, %s183
      %p197 = scmp.eq.s32.totalorder %s25, 3
      %p198 = por %p196, %p197
      %p200 = scmp.ne.s32.totalorder %s183, %s199
      %p201 = scmp.eq.s32.totalorder %s25, 0
      %p202 = por %p200, %p201
      %s203 = ssub.s32 3, %s27
      %s204 = ssub.s32 3, %s34
      %s205 = ssub.s32 %s203, %s204
      %p206 = scmp.eq.s32.totalorder %s205, 0
      %s208 = sadd.s32 %s207, 1
      %s209 = scalar_select %p206, %s207, %s208
      %p212 = pneg %p206
      %p213 = scmp.eq.s32.totalorder %s19, 3
      %p214 = por %p212, %p213
      %p215 = scmp.ne.s32.totalorder %s207, %s210
      %p216 = scmp.eq.s32.totalorder %s19, 0
      %p217 = por %p215, %p216
      %p218 = scmp.ne.s32.totalorder %s207, %s210
      %p219 = scmp.eq.s32.totalorder %s24, 3
      %p220 = por %p218, %p219
      %p221 = scmp.ne.s32.totalorder %s210, %s211
      %p222 = scmp.eq.s32.totalorder %s24, 0
      %p223 = por %p221, %p222
      %p224 = scmp.ne.s32.totalorder %s210, %s211
      %p225 = scmp.eq.s32.totalorder %s25, 3
      %p226 = por %p224, %p225
      %p228 = scmp.ne.s32.totalorder %s211, %s227
      %p229 = scmp.eq.s32.totalorder %s25, 0
      %p230 = por %p228, %p229
      %s231 = ssub.s32 3, %s27
      %s232 = ssub.s32 3, %s34
      %s233 = ssub.s32 %s231, %s232
      %p234 = scmp.eq.s32.totalorder %s233, 0
      %s236 = sadd.s32 %s235, 1
      %s237 = scalar_select %p234, %s235, %s236
      %p240 = pneg %p234
      %p241 = scmp.eq.s32.totalorder %s19, 3
      %p242 = por %p240, %p241
      %p243 = scmp.ne.s32.totalorder %s235, %s238
      %p244 = scmp.eq.s32.totalorder %s19, 0
      %p245 = por %p243, %p244
      %p246 = scmp.ne.s32.totalorder %s235, %s238
      %p247 = scmp.eq.s32.totalorder %s24, 3
      %p248 = por %p246, %p247
      %p249 = scmp.ne.s32.totalorder %s238, %s239
      %p250 = scmp.eq.s32.totalorder %s24, 0
      %p251 = por %p249, %p250
      %p252 = scmp.ne.s32.totalorder %s238, %s239
      %p253 = scmp.eq.s32.totalorder %s25, 3
      %p254 = por %p252, %p253
      %p256 = scmp.ne.s32.totalorder %s239, %s255
      %p257 = scmp.eq.s32.totalorder %s25, 0
      %p258 = por %p256, %p257
      %s259 = ssub.s32 3, %s27
      %s260 = ssub.s32 3, %s34
      %s261 = ssub.s32 %s259, %s260
      %p262 = scmp.eq.s32.totalorder %s261, 0
      %s264 = sadd.s32 %s263, 1
      %s265 = scalar_select %p262, %s263, %s264
      %p268 = pneg %p262
      %p269 = scmp.eq.s32.totalorder %s19, 3
      %p270 = por %p268, %p269
      %p271 = scmp.ne.s32.totalorder %s263, %s266
      %p272 = scmp.eq.s32.totalorder %s19, 0
      %p273 = por %p271, %p272
      %p274 = scmp.ne.s32.totalorder %s263, %s266
      %p275 = scmp.eq.s32.totalorder %s24, 3
      %p276 = por %p274, %p275
      %p277 = scmp.ne.s32.totalorder %s266, %s267
      %p278 = scmp.eq.s32.totalorder %s24, 0
      %p279 = por %p277, %p278
      %p280 = scmp.ne.s32.totalorder %s266, %s267
      %p281 = scmp.eq.s32.totalorder %s25, 3
      %p282 = por %p280, %p281
      %p284 = scmp.ne.s32.totalorder %s267, %s283
      %p285 = scmp.eq.s32.totalorder %s25, 0
      %p286 = por %p284, %p285
      %s287 = ssub.s32 3, %s27
      %s288 = ssub.s32 3, %s34
      %s289 = ssub.s32 %s287, %s288
      %p290 = scmp.eq.s32.totalorder %s289, 0
      %s292 = sadd.s32 %s291, 1
      %s293 = scalar_select %p290, %s291, %s292
      %p296 = pneg %p290
      %p297 = scmp.eq.s32.totalorder %s19, 3
      %p298 = por %p296, %p297
      %p299 = scmp.ne.s32.totalorder %s291, %s294
      %p300 = scmp.eq.s32.totalorder %s19, 0
      %p301 = por %p299, %p300
      %p302 = scmp.ne.s32.totalorder %s291, %s294
      %p303 = scmp.eq.s32.totalorder %s24, 3
      %p304 = por %p302, %p303
      %p305 = scmp.ne.s32.totalorder %s294, %s295
      %p306 = scmp.eq.s32.totalorder %s24, 0
      %p307 = por %p305, %p306
      %p308 = scmp.ne.s32.totalorder %s294, %s295
      %p309 = scmp.eq.s32.totalorder %s25, 3
      %p310 = por %p308, %p309
      %p312 = scmp.ne.s32.totalorder %s295, %s311
      %p313 = scmp.eq.s32.totalorder %s25, 0
      %p314 = por %p312, %p313
      %s315 = ssub.s32 %s26, %s38
      %p316 = scmp.eq.s32.totalorder %s315, 0
      %s318 = sadd.s32 %s317, 1
      %s319 = scalar_select %p316, %s317, %s318
      %p322 = pneg %p316
      %p323 = scmp.eq.s32.totalorder %s19, 3
      %p324 = por %p322, %p323
      %p325 = scmp.ne.s32.totalorder %s317, %s320
      %p326 = scmp.eq.s32.totalorder %s19, 0
      %p327 = por %p325, %p326
      %p328 = scmp.ne.s32.totalorder %s317, %s320
      %p329 = scmp.eq.s32.totalorder %s24, 3
      %p330 = por %p328, %p329
      %p331 = scmp.ne.s32.totalorder %s320, %s321
      %p332 = scmp.eq.s32.totalorder %s24, 0
      %p333 = por %p331, %p332
      %p334 = scmp.ne.s32.totalorder %s320, %s321
      %p335 = scmp.eq.s32.totalorder %s25, 3
      %p336 = por %p334, %p335
      %p338 = scmp.ne.s32.totalorder %s321, %s337
      %p339 = scmp.eq.s32.totalorder %s25, 0
      %p340 = por %p338, %p339
      %s341 = ssub.s32 %s26, %s38
      %p342 = scmp.eq.s32.totalorder %s341, 0
      %s344 = sadd.s32 %s343, 1
      %s345 = scalar_select %p342, %s343, %s344
      %p348 = pneg %p342
      %p349 = scmp.eq.s32.totalorder %s19, 3
      %p350 = por %p348, %p349
      %p351 = scmp.ne.s32.totalorder %s343, %s346
      %p352 = scmp.eq.s32.totalorder %s19, 0
      %p353 = por %p351, %p352
      %p354 = scmp.ne.s32.totalorder %s343, %s346
      %p355 = scmp.eq.s32.totalorder %s24, 3
      %p356 = por %p354, %p355
      %p357 = scmp.ne.s32.totalorder %s346, %s347
      %p358 = scmp.eq.s32.totalorder %s24, 0
      %p359 = por %p357, %p358
      %p360 = scmp.ne.s32.totalorder %s346, %s347
      %p361 = scmp.eq.s32.totalorder %s25, 3
      %p362 = por %p360, %p361
      %p364 = scmp.ne.s32.totalorder %s347, %s363
      %p365 = scmp.eq.s32.totalorder %s25, 0
      %p366 = por %p364, %p365
      %p367 = scmp.le.s32.totalorder 1, %s19
      %p368 = scmp.lt.s32.totalorder %s19, 5
      %p369 = pnand %p367, %p368
      %p370 = pneg %p369
      // Predicated region
      $region9: #{realnvp_forward.1} parent=5 // pred_check
        _
      $region10: #{realnvp_forward.1} parent=5 // pred_check_branch
        %372 = sbr.rel (%p369) target = $region12
      $region11: #{realnvp_forward.1} parent=5 // pred_region
        %s373 = ssub.s32 %s19, 1
        // Predicated region
        $region13: #{realnvp_forward.1} parent=11 // pred_check
          %p374 = pneg %p57
        $region14: #{realnvp_forward.1} parent=11 // pred_check_branch
          %376 = sbr.rel (%p374) target = $region16
        $region15: #{realnvp_forward.1} parent=11 // pred_region
          %p377 = scmp.lt.s32.totalorder %s28, 0
          %s378 = scalar_select %p377, %s28, 0
          %s379 = smul.addr %s378, 8
          %s380 = scalar_lea.vmem %s0, %s379
        $region16: #{realnvp_forward.1} parent=11 // pred_fallthru
          _
        // Predicated region
        $region17: #{realnvp_forward.1} parent=11 // pred_check
          %p381 = pneg %p83
        $region18: #{realnvp_forward.1} parent=11 // pred_check_branch
          %383 = sbr.rel (%p381) target = $region20
        $region19: #{realnvp_forward.1} parent=11 // pred_region
          %p384 = scmp.lt.s32.totalorder %s28, 0
          %s385 = scalar_select %p384, %s28, 0
          %s386 = smul.addr %s385, 8
          %s387 = scalar_lea.vmem %s1, %s386
        $region20: #{realnvp_forward.1} parent=11 // pred_fallthru
          _
      $region12: #{realnvp_forward.1} parent=5 // pred_fallthru
        _
      %p388 = scmp.lt.s32.totalorder %s19, 4
      // Predicated region
      $region21: #{realnvp_forward.1} parent=5 // pred_check
        %p389 = pneg %p388
      $region22: #{realnvp_forward.1} parent=5 // pred_check_branch
        %391 = sbr.rel (%p389) target = $region24
      $region23: #{realnvp_forward.1} parent=5 // pred_region
        // Predicated region
        $region25: #{realnvp_forward.1} parent=23 // pred_check
          %p392 = pneg %p105
        $region26: #{realnvp_forward.1} parent=23 // pred_check_branch
          %394 = sbr.rel (%p392) target = $region28
        $region27: #{realnvp_forward.1} parent=23 // pred_region
          %s395 = ssub.s32 3, %s27
          %p396 = scmp.lt.s32.totalorder %s395, 3
          %s397 = scalar_select %p396, %s395, 3
          %s398 = scalar_lea.vmem %s2, %s397
          %s399 = ssub.s32 3, %s27
        $region28: #{realnvp_forward.1} parent=23 // pred_fallthru
          _
        // Predicated region
        $region29: #{realnvp_forward.1} parent=23 // pred_check
          %p400 = pneg %p133
        $region30: #{realnvp_forward.1} parent=23 // pred_check_branch
          %402 = sbr.rel (%p400) target = $region32
        $region31: #{realnvp_forward.1} parent=23 // pred_region
          %s403 = ssub.s32 3, %s27
          %p404 = scmp.lt.s32.totalorder %s403, 3
          %s405 = scalar_select %p404, %s403, 3
          %s406 = smul.addr %s405, 4
          %s407 = scalar_lea.vmem %s3, %s406
          %s408 = ssub.s32 3, %s27
        $region32: #{realnvp_forward.1} parent=23 // pred_fallthru
          _
        // Predicated region
        $region33: #{realnvp_forward.1} parent=23 // pred_check
          %p409 = pneg %p161
        $region34: #{realnvp_forward.1} parent=23 // pred_check_branch
          %411 = sbr.rel (%p409) target = $region36
        $region35: #{realnvp_forward.1} parent=23 // pred_region
          %s412 = ssub.s32 3, %s27
          %p413 = scmp.lt.s32.totalorder %s412, 3
          %s414 = scalar_select %p413, %s412, 3
          %s415 = smul.addr %s414, 2
          %s416 = scalar_lea.vmem %s4, %s415
          %s417 = ssub.s32 3, %s27
        $region36: #{realnvp_forward.1} parent=23 // pred_fallthru
          _
        // Predicated region
        $region37: #{realnvp_forward.1} parent=23 // pred_check
          %p418 = pneg %p189
        $region38: #{realnvp_forward.1} parent=23 // pred_check_branch
          %420 = sbr.rel (%p418) target = $region40
        $region39: #{realnvp_forward.1} parent=23 // pred_region
          %s421 = ssub.s32 3, %s27
          %p422 = scmp.lt.s32.totalorder %s421, 3
          %s423 = scalar_select %p422, %s421, 3
          %s424 = scalar_lea.vmem %s5, %s423
          %s425 = ssub.s32 3, %s27
        $region40: #{realnvp_forward.1} parent=23 // pred_fallthru
          _
        // Predicated region
        $region41: #{realnvp_forward.1} parent=23 // pred_check
          %p426 = pneg %p217
        $region42: #{realnvp_forward.1} parent=23 // pred_check_branch
          %428 = sbr.rel (%p426) target = $region44
        $region43: #{realnvp_forward.1} parent=23 // pred_region
          %s429 = ssub.s32 3, %s27
          %p430 = scmp.lt.s32.totalorder %s429, 3
          %s431 = scalar_select %p430, %s429, 3
          %s432 = smul.addr %s431, 8
          %s433 = smul.addr %s432, 4
          %s434 = scalar_lea.vmem %s6, %s433
          %s435 = ssub.s32 3, %s27
        $region44: #{realnvp_forward.1} parent=23 // pred_fallthru
          _
        // Predicated region
        $region45: #{realnvp_forward.1} parent=23 // pred_check
          %p436 = pneg %p245
        $region46: #{realnvp_forward.1} parent=23 // pred_check_branch
          %438 = sbr.rel (%p436) target = $region48
        $region47: #{realnvp_forward.1} parent=23 // pred_region
          %s439 = ssub.s32 3, %s27
          %p440 = scmp.lt.s32.totalorder %s439, 3
          %s441 = scalar_select %p440, %s439, 3
          %s442 = scalar_lea.vmem %s7, %s441
          %s443 = ssub.s32 3, %s27
        $region48: #{realnvp_forward.1} parent=23 // pred_fallthru
          _
        // Predicated region
        $region49: #{realnvp_forward.1} parent=23 // pred_check
          %p444 = pneg %p273
        $region50: #{realnvp_forward.1} parent=23 // pred_check_branch
          %446 = sbr.rel (%p444) target = $region52
        $region51: #{realnvp_forward.1} parent=23 // pred_region
          %s447 = ssub.s32 3, %s27
          %p448 = scmp.lt.s32.totalorder %s447, 3
          %s449 = scalar_select %p448, %s447, 3
          %s450 = smul.addr %s449, 8
          %s451 = smul.addr %s450, 4
          %s452 = scalar_lea.vmem %s8, %s451
          %s453 = ssub.s32 3, %s27
        $region52: #{realnvp_forward.1} parent=23 // pred_fallthru
          _
        // Predicated region
        $region53: #{realnvp_forward.1} parent=23 // pred_check
          %p454 = pneg %p301
        $region54: #{realnvp_forward.1} parent=23 // pred_check_branch
          %456 = sbr.rel (%p454) target = $region56
        $region55: #{realnvp_forward.1} parent=23 // pred_region
          %s457 = ssub.s32 3, %s27
          %p458 = scmp.lt.s32.totalorder %s457, 3
          %s459 = scalar_select %p458, %s457, 3
          %s460 = scalar_lea.vmem %s9, %s459
          %s461 = ssub.s32 3, %s27
        $region56: #{realnvp_forward.1} parent=23 // pred_fallthru
          _
      $region24: #{realnvp_forward.1} parent=5 // pred_fallthru
        _
      %p462 = scmp.le.s32.totalorder 1, %s19
      %p463 = scmp.lt.s32.totalorder %s19, 5
      %p464 = pnand %p462, %p463
      %p465 = pneg %p464
      // Predicated region
      $region57: #{realnvp_forward.1} parent=5 // pred_check
        _
      $region58: #{realnvp_forward.1} parent=5 // pred_check_branch
        %467 = sbr.rel (%p464) target = $region60
      $region59: #{realnvp_forward.1} parent=5 // pred_region
        %s468 = ssub.s32 %s19, 1
        %p469 = scmp.lt.s32.totalorder %s28, 0
        %s470 = scalar_select %p469, %s28, 0
        %s471 = smul.addr %s470, 8
        %s472 = scalar_lea.vmem %s0, %s471
        %p473 = pneg %p57
        %p474 = pneg %p54
        %p475 = scmp.lt.s32.totalorder %s28, 0
        %s476 = scalar_select %p475, %s28, 0
        %s477 = smul.addr %s476, 8
        %s478 = scalar_lea.vmem %s1, %s477
        %p479 = pneg %p83
        %p480 = pneg %p80
        %s481 = ssub.s32 3, %s29
        %p482 = scmp.lt.s32.totalorder %s481, 3
        %s483 = scalar_select %p482, %s481, 3
        %s484 = scalar_lea.vmem %s2, %s483
        %p485 = pneg %p111
        %p486 = pneg %p108
        %s487 = ssub.s32 3, %s29
        %p488 = scmp.lt.s32.totalorder %s487, 3
        %s489 = scalar_select %p488, %s487, 3
        %s490 = smul.addr %s489, 4
        %s491 = scalar_lea.vmem %s3, %s490
        %p492 = pneg %p139
        %p493 = pneg %p136
        %s494 = ssub.s32 3, %s29
        %p495 = scmp.lt.s32.totalorder %s494, 3
        %s496 = scalar_select %p495, %s494, 3
        %s497 = smul.addr %s496, 2
        %s498 = scalar_lea.vmem %s4, %s497
        %p499 = pneg %p167
        %p500 = pneg %p164
        %s501 = ssub.s32 3, %s29
        %p502 = scmp.lt.s32.totalorder %s501, 3
        %s503 = scalar_select %p502, %s501, 3
        %s504 = scalar_lea.vmem %s5, %s503
        %p505 = pneg %p195
        %p506 = pneg %p192
        %s507 = ssub.s32 3, %s29
        %p508 = scmp.lt.s32.totalorder %s507, 3
        %s509 = scalar_select %p508, %s507, 3
        %s510 = smul.addr %s509, 8
        %s511 = smul.addr %s510, 4
        %s512 = scalar_lea.vmem %s6, %s511
        %p513 = pneg %p223
        %p514 = pneg %p220
        %s515 = ssub.s32 3, %s29
        %p516 = scmp.lt.s32.totalorder %s515, 3
        %s517 = scalar_select %p516, %s515, 3
        %s518 = scalar_lea.vmem %s7, %s517
        %p519 = pneg %p251
        %p520 = pneg %p248
        %s521 = ssub.s32 3, %s29
        %p522 = scmp.lt.s32.totalorder %s521, 3
        %s523 = scalar_select %p522, %s521, 3
        %s524 = smul.addr %s523, 8
        %s525 = smul.addr %s524, 4
        %s526 = scalar_lea.vmem %s8, %s525
        %p527 = pneg %p279
        %p528 = pneg %p276
        %s529 = ssub.s32 3, %s29
        %p530 = scmp.lt.s32.totalorder %s529, 3
        %s531 = scalar_select %p530, %s529, 3
        %s532 = scalar_lea.vmem %s9, %s531
        %p533 = pneg %p307
        %p534 = pneg %p304
        %p535 = pneg %p333
        %p536 = pneg %p330
        %p537 = pneg %p359
        %p538 = pneg %p356
        %p539 = scmp.lt.s32.totalorder %s28, 0
        %s540 = scalar_select %p539, %s28, 0
        %s541 = smul.addr %s540, 8
        %s542 = scalar_lea.vmem %s11, %s541
        %p543 = scmp.lt.s32.totalorder %s28, 0
        %s544 = scalar_select %p543, %s28, 0
        %s545 = smul.addr %s544, 8
        %s546 = scalar_lea.vmem %s0, %s545
        %p547 = scmp.lt.s32.totalorder %s28, 0
        %s548 = scalar_select %p547, %s28, 0
        %s549 = smul.addr %s548, 8
        %s550 = scalar_lea.vmem %s1, %s549
        %s551 = ssub.s32 3, %s29
        %p552 = scmp.lt.s32.totalorder %s551, 3
        %s553 = scalar_select %p552, %s551, 3
        %s554 = scalar_lea.vmem %s2, %s553
        %s555 = ssub.s32 3, %s29
        %s556 = ssub.s32 3, %s29
        %p557 = scmp.lt.s32.totalorder %s556, 3
        %s558 = scalar_select %p557, %s556, 3
        %s559 = smul.addr %s558, 4
        %s560 = scalar_lea.vmem %s3, %s559
        %s561 = ssub.s32 3, %s29
        %s562 = ssub.s32 3, %s29
        %p563 = scmp.lt.s32.totalorder %s562, 3
        %s564 = scalar_select %p563, %s562, 3
        %s565 = smul.addr %s564, 2
        %s566 = scalar_lea.vmem %s4, %s565
        %s567 = ssub.s32 3, %s29
        %s568 = ssub.s32 3, %s29
        %p569 = scmp.lt.s32.totalorder %s568, 3
        %s570 = scalar_select %p569, %s568, 3
        %s571 = scalar_lea.vmem %s5, %s570
        %s572 = ssub.s32 3, %s29
        %s573 = ssub.s32 3, %s29
        %p574 = scmp.lt.s32.totalorder %s573, 3
        %s575 = scalar_select %p574, %s573, 3
        %s576 = smul.addr %s575, 8
        %s577 = smul.addr %s576, 4
        %s578 = scalar_lea.vmem %s6, %s577
        %s579 = ssub.s32 3, %s29
        %s580 = ssub.s32 3, %s29
        %p581 = scmp.lt.s32.totalorder %s580, 3
        %s582 = scalar_select %p581, %s580, 3
        %s583 = scalar_lea.vmem %s7, %s582
        %s584 = ssub.s32 3, %s29
        %s585 = ssub.s32 3, %s29
        %p586 = scmp.lt.s32.totalorder %s585, 3
        %s587 = scalar_select %p586, %s585, 3
        %s588 = smul.addr %s587, 8
        %s589 = smul.addr %s588, 4
        %s590 = scalar_lea.vmem %s8, %s589
        %s591 = ssub.s32 3, %s29
        %s592 = ssub.s32 3, %s29
        %p593 = scmp.lt.s32.totalorder %s592, 3
        %s594 = scalar_select %p593, %s592, 3
        %s595 = scalar_lea.vmem %s9, %s594
        %s596 = ssub.s32 3, %s29
        %p597 = scmp.lt.s32.totalorder %s28, 0
        %s598 = scalar_select %p597, %s28, 0
        %s599 = smul.addr %s598, 8
        %s600 = scalar_lea.vmem %s11, %s599
        %p602 = scmp.eq.s32.totalorder %s29, 0
        // Predicated region
        $region61: #{realnvp_forward.1} parent=59 // pred_check
          %p603 = pneg %p602
        $region62: #{realnvp_forward.1} parent=59 // pred_check_branch
          %605 = sbr.rel (%p603) target = $region64
        $region63: #{realnvp_forward.1} parent=59 // pred_region
          %v606 = vld [vmem:[%s546] sm:$0xff]
          %vm607 = vcmask 64512
          %608 = vst.msk [vmem:[#allocation2] sm:$0xff] %vm607, %v606
          %609 = vst.msk [vmem:[%s600] sm:$0xff] %vm607, 0.0
        $region64: #{realnvp_forward.1} parent=59 // pred_fallthru
          _
        %v610 = vld [vmem:[#allocation2] sm:$0xff]
        %v611 = vld [vmem:[%s554] sm:$0x1]
        %v612 = vsub.f32 1.0, %v611
        %v614 = vlaneseq
        %v615 = vshrl.u32 %v614, 7
        %v616 = vsub.s32 0, %v615
        %v617 = vrot.slane %v611, %v616
        %v619 = vmul.f32 %v610, %v617
        %v620 = vpack.c.bf16 %v619, %v619
        %v621 = vld [vmem:[%s550] sm:$0xff]
        %v622 = vpack.c.bf16 %v621, %v621
        %v623 = vld [vmem:[%s560] sm:$0xf]
        %v624 = vld [vmem:[%s566] sm:$0x3]
        %vm625 = vcmask 31744
        %v627 = vsel %vm625, %v622, 0
        %vm629 = vcmask 1041408
        %v631 = vsel %vm629, %v624, 0
        %633 = vmatprep.subr.bf16.mxu0 0
        %634 = vmatpush1.bf16.msra.mxu0 %v631
        %635 = vmatprep.subr.bf16.mxu0 0
        %636 = vmatpush1.bf16.msra.mxu0 0
        %637 = vmatprep.subr.bf16.mxu0 0
        %638 = vmatpush1.bf16.msra.mxu0 0
        %639 = vmatprep.subr.bf16.mxu0 0
        %640 = vmatpush1.bf16.msra.mxu0 0
        %641 = vmatprep.subr.bf16.mxu0 0
        %642 = vmatpush1.bf16.msra.mxu0 0
        %643 = vmatprep.subr.bf16.mxu0 0
        %644 = vmatpush1.bf16.msra.mxu0 0
        %645 = vmatprep.subr.bf16.mxu0 0
        %646 = vmatpush1.bf16.msra.mxu0 0
        %647 = vmatprep.subr.bf16.mxu0 0
        %648 = vmatpush1.bf16.msra.mxu0 0
        %649 = vmatprep.subr.bf16.mxu0 0
        %650 = vmatpush1.bf16.msra.mxu0 0
        %651 = vmatprep.subr.bf16.mxu0 0
        %652 = vmatpush1.bf16.msra.mxu0 0
        %653 = vmatprep.subr.bf16.mxu0 0
        %654 = vmatpush1.bf16.msra.mxu0 0
        %655 = vmatprep.subr.bf16.mxu0 0
        %656 = vmatpush1.bf16.msra.mxu0 0
        %657 = vmatprep.subr.bf16.mxu0 0
        %658 = vmatpush1.bf16.msra.mxu0 0
        %659 = vmatprep.subr.bf16.mxu0 0
        %660 = vmatpush1.bf16.msra.mxu0 0
        %661 = vmatprep.subr.bf16.mxu0 0
        %662 = vmatpush1.bf16.msra.mxu0 0
        %663 = vmatprep.subr.bf16.mxu0 0
        %664 = vmatpush1.bf16.msra.mxu0 0
        %665 = vmatprep.mubr.bf16.mxu0 0
        %666 = vmatmul.mubr.bf16.gmra.mrb[0].mxu0 %v627
        %v667 = vpop.f32.mrb[0].mxu0
        %v668 = vadd.f32 0.0, %v667
        %v669 = vpop.f32.mrb[0].mxu0
        %v670 = vpop.f32.mrb[0].mxu0
        %v671 = vpop.f32.mrb[0].mxu0
        %672 = vdwg.mxu0
        %vm673 = vcmask 64512
        %v675 = vsel %vm673, %v620, 0
        %vm677 = vcmask 1043456
        %v679 = vsel %vm677, %v623, 0
        %681 = vmatprep.subr.bf16.mxu0 0
        %682 = vmatpush1.bf16.msra.mxu0 %v679
        %683 = vmatprep.subr.bf16.mxu0 0
        %684 = vmatpush1.bf16.msra.mxu0 0
        %685 = vmatprep.subr.bf16.mxu0 0
        %686 = vmatpush1.bf16.msra.mxu0 0
        %687 = vmatprep.subr.bf16.mxu0 0
        %688 = vmatpush1.bf16.msra.mxu0 0
        %689 = vmatprep.subr.bf16.mxu0 0
        %690 = vmatpush1.bf16.msra.mxu0 0
        %691 = vmatprep.subr.bf16.mxu0 0
        %692 = vmatpush1.bf16.msra.mxu0 0
        %693 = vmatprep.subr.bf16.mxu0 0
        %694 = vmatpush1.bf16.msra.mxu0 0
        %695 = vmatprep.subr.bf16.mxu0 0
        %696 = vmatpush1.bf16.msra.mxu0 0
        %697 = vmatprep.subr.bf16.mxu0 0
        %698 = vmatpush1.bf16.msra.mxu0 0
        %699 = vmatprep.subr.bf16.mxu0 0
        %700 = vmatpush1.bf16.msra.mxu0 0
        %701 = vmatprep.subr.bf16.mxu0 0
        %702 = vmatpush1.bf16.msra.mxu0 0
        %703 = vmatprep.subr.bf16.mxu0 0
        %704 = vmatpush1.bf16.msra.mxu0 0
        %705 = vmatprep.subr.bf16.mxu0 0
        %706 = vmatpush1.bf16.msra.mxu0 0
        %707 = vmatprep.subr.bf16.mxu0 0
        %708 = vmatpush1.bf16.msra.mxu0 0
        %709 = vmatprep.subr.bf16.mxu0 0
        %710 = vmatpush1.bf16.msra.mxu0 0
        %711 = vmatprep.subr.bf16.mxu0 0
        %712 = vmatpush1.bf16.msra.mxu0 0
        %713 = vmatprep.mubr.bf16.mxu0 0
        %714 = vmatmul.mubr.bf16.gmra.mrb[0].mxu0 %v675
        %v715 = vpop.f32.mrb[0].mxu0
        %v716 = vadd.f32 %v668, %v715
        %v717 = vpop.f32.mrb[0].mxu0
        %v718 = vpop.f32.mrb[0].mxu0
        %v719 = vpop.f32.mrb[0].mxu0
        %720 = vdwg.mxu0
        %v721 = vld [vmem:[%s571] sm:$0x1]
        %v723 = vlaneseq
        %v724 = vshrl.u32 %v723, 7
        %v725 = vsub.s32 0, %v724
        %v726 = vrot.slane %v721, %v725
        %v728 = vadd.f32 %v716, %v726
        %v729 = vmax.f32 %v728, 0.0
        %v730 = vpack.c.bf16 %v729, %v729
        %v731 = vld [vmem:[%s578] sm:$0xf]
        %v732 = vld [vmem:[%s578 + $0x4] sm:$0xf]
        %v733 = vld [vmem:[%s578 + $0x8] sm:$0xf]
        %v734 = vld [vmem:[%s578 + $0xc] sm:$0xf]
        %v735 = vld [vmem:[%s578 + $0x10] sm:$0xf]
        %v736 = vld [vmem:[%s578 + $0x14] sm:$0xf]
        %v737 = vld [vmem:[%s578 + $0x18] sm:$0xf]
        %v738 = vld [vmem:[%s578 + $0x1c] sm:$0xf]
        %v739 = vld [vmem:[%s583] sm:$0x1]
        %v741 = vlaneseq
        %v742 = vshrl.u32 %v741, 7
        %v743 = vsub.s32 0, %v742
        %v744 = vrot.slane %v739, %v743
        %v754 = vunpack.c.l.b16 %v731
        %v755 = vunpack.c.l.b16 %v732
        %v756 = vunpack.c.l.b16 %v733
        %v757 = vunpack.c.l.b16 %v734
        %v758 = vunpack.c.l.b16 %v735
        %v759 = vunpack.c.l.b16 %v736
        %v760 = vunpack.c.l.b16 %v737
        %v761 = vunpack.c.l.b16 %v738
        %v762 = vpack.c.b16 %v755, %v754
        %v763 = vpack.c.b16 %v757, %v756
        %v764 = vpack.c.b16 %v759, %v758
        %v765 = vpack.c.b16 %v761, %v760
        %vm770 = vcmask 523264
        %v772 = vsel %vm770, %v730, 0
        %774 = vmatprep.subr.bf16.mxu0 0
        %775 = vmatpush1.bf16.msra.mxu0 %v762
        %776 = vmatprep.subr.bf16.mxu0 0
        %777 = vmatpush1.bf16.msra.mxu0 %v763
        %778 = vmatprep.subr.bf16.mxu0 0
        %779 = vmatpush1.bf16.msra.mxu0 %v764
        %780 = vmatprep.subr.bf16.mxu0 0
        %781 = vmatpush1.bf16.msra.mxu0 %v765
        %782 = vmatprep.subr.bf16.mxu0 0
        %783 = vmatpush1.bf16.msra.mxu0 0
        %784 = vmatprep.subr.bf16.mxu0 0
        %785 = vmatpush1.bf16.msra.mxu0 0
        %786 = vmatprep.subr.bf16.mxu0 0
        %787 = vmatpush1.bf16.msra.mxu0 0
        %788 = vmatprep.subr.bf16.mxu0 0
        %789 = vmatpush1.bf16.msra.mxu0 0
        %790 = vmatprep.subr.bf16.mxu0 0
        %791 = vmatpush1.bf16.msra.mxu0 0
        %792 = vmatprep.subr.bf16.mxu0 0
        %793 = vmatpush1.bf16.msra.mxu0 0
        %794 = vmatprep.subr.bf16.mxu0 0
        %795 = vmatpush1.bf16.msra.mxu0 0
        %796 = vmatprep.subr.bf16.mxu0 0
        %797 = vmatpush1.bf16.msra.mxu0 0
        %798 = vmatprep.subr.bf16.mxu0 0
        %799 = vmatpush1.bf16.msra.mxu0 0
        %800 = vmatprep.subr.bf16.mxu0 0
        %801 = vmatpush1.bf16.msra.mxu0 0
        %802 = vmatprep.subr.bf16.mxu0 0
        %803 = vmatpush1.bf16.msra.mxu0 0
        %804 = vmatprep.subr.bf16.mxu0 0
        %805 = vmatpush1.bf16.msra.mxu0 0
        %806 = vmatprep.mubr.bf16.mxu0 0
        %807 = vmatmul.mubr.bf16.gmra.mrb[0].mxu0 %v772
        %v808 = vpop.f32.mrb[0].mxu0
        %v809 = vadd.f32 %v744, %v808
        %v810 = vpop.f32.mrb[0].mxu0
        %v811 = vpop.f32.mrb[0].mxu0
        %v812 = vpop.f32.mrb[0].mxu0
        %813 = vdwg.mxu0
        %v814 = vmax.f32 %v809, 0.0
        %v815 = vpack.c.bf16 %v814, %v814
        %v816 = vld [vmem:[%s590] sm:$0xf]
        %v817 = vld [vmem:[%s590 + $0x4] sm:$0xf]
        %v818 = vld [vmem:[%s590 + $0x8] sm:$0xf]
        %v819 = vld [vmem:[%s590 + $0xc] sm:$0xf]
        %v820 = vld [vmem:[%s590 + $0x10] sm:$0xf]
        %v821 = vld [vmem:[%s590 + $0x14] sm:$0xf]
        %v822 = vld [vmem:[%s590 + $0x18] sm:$0xf]
        %v823 = vld [vmem:[%s590 + $0x1c] sm:$0xf]
        %v824 = vld [vmem:[%s595] sm:$0x1]
        %v826 = vlaneseq
        %v827 = vshrl.u32 %v826, 7
        %v828 = vsub.s32 0, %v827
        %v829 = vrot.slane %v824, %v828
        %v839 = vunpack.c.l.b16 %v816
        %v840 = vunpack.c.l.b16 %v817
        %v841 = vunpack.c.l.b16 %v818
        %v842 = vunpack.c.l.b16 %v819
        %v843 = vunpack.c.l.b16 %v820
        %v844 = vunpack.c.l.b16 %v821
        %v845 = vunpack.c.l.b16 %v822
        %v846 = vunpack.c.l.b16 %v823
        %v847 = vpack.c.b16 %v840, %v839
        %v848 = vpack.c.b16 %v842, %v841
        %v849 = vpack.c.b16 %v844, %v843
        %v850 = vpack.c.b16 %v846, %v845
        %v856 = vsel %vm770, %v815, 0
        %858 = vmatprep.subr.bf16.mxu0 0
        %859 = vmatpush1.bf16.msra.mxu0 %v847
        %860 = vmatprep.subr.bf16.mxu0 0
        %861 = vmatpush1.bf16.msra.mxu0 %v848
        %862 = vmatprep.subr.bf16.mxu0 0
        %863 = vmatpush1.bf16.msra.mxu0 %v849
        %864 = vmatprep.subr.bf16.mxu0 0
        %865 = vmatpush1.bf16.msra.mxu0 %v850
        %866 = vmatprep.subr.bf16.mxu0 0
        %867 = vmatpush1.bf16.msra.mxu0 0
        %868 = vmatprep.subr.bf16.mxu0 0
        %869 = vmatpush1.bf16.msra.mxu0 0
        %870 = vmatprep.subr.bf16.mxu0 0
        %871 = vmatpush1.bf16.msra.mxu0 0
        %872 = vmatprep.subr.bf16.mxu0 0
        %873 = vmatpush1.bf16.msra.mxu0 0
        %874 = vmatprep.subr.bf16.mxu0 0
        %875 = vmatpush1.bf16.msra.mxu0 0
        %876 = vmatprep.subr.bf16.mxu0 0
        %877 = vmatpush1.bf16.msra.mxu0 0
        %878 = vmatprep.subr.bf16.mxu0 0
        %879 = vmatpush1.bf16.msra.mxu0 0
        %880 = vmatprep.subr.bf16.mxu0 0
        %881 = vmatpush1.bf16.msra.mxu0 0
        %882 = vmatprep.subr.bf16.mxu0 0
        %883 = vmatpush1.bf16.msra.mxu0 0
        %884 = vmatprep.subr.bf16.mxu0 0
        %885 = vmatpush1.bf16.msra.mxu0 0
        %886 = vmatprep.subr.bf16.mxu0 0
        %887 = vmatpush1.bf16.msra.mxu0 0
        %888 = vmatprep.subr.bf16.mxu0 0
        %889 = vmatpush1.bf16.msra.mxu0 0
        %890 = vmatprep.mubr.bf16.mxu0 0
        %891 = vmatmul.mubr.bf16.gmra.mrb[0].mxu0 %v856
        %v892 = vpop.f32.mrb[0].mxu0
        %v893 = vadd.f32 %v829, %v892
        %v894 = vpop.f32.mrb[0].mxu0
        %v895 = vpop.f32.mrb[0].mxu0
        %v896 = vpop.f32.mrb[0].mxu0
        %897 = vdwg.mxu0
        %v898 = vtanh.pop %v893
        %v900 = vlaneseq
        %v901 = vshrl.u32 %v900, 7
        %v902 = vsub.s32 0, %v901
        %v903 = vrot.slane %v612, %v902
        %v905 = vmul.f32 %v898, %v903
        %906 = vrot.lane.b32.xlu0 %v903, 8
        %v907 = vpop.permute.xlu0 %906
        %v909 = vmul.f32 %v893, %v907
        %911 = vrot.lane.b32.xlu0 %v909, 120
        %v912 = vpop.permute.xlu0 %911
        %v914 = vsub.f32 %v610, %v912
        %v915 = vmul.f32 %v903, %v914
        %v916 = vsub.f32 0.0, %v905
        %v917 = vmul.f32 %v916, 1.442695
        %v918 = vpow.pop %v917
        %v919 = vmul.f32 %v915, %v918
        %v920 = vadd.f32 %v919, %v619
        %921 = vst.msk [vmem:[#allocation2] sm:$0xff] %vm673, %v920
        %v922 = vld [vmem:[%s600] sm:$0xff]
        %v923 = vsub.f32 %v922, %v905
        %924 = vst.msk [vmem:[%s600] sm:$0xff] %vm673, %v923
        %p925 = scmp.lt.s32.totalorder %s28, 0
        %s926 = scalar_select %p925, %s28, 0
        %s927 = smul.addr %s926, 8
        %s928 = scalar_lea.vmem %s11, %s927
        // Predicated region
        $region65: #{realnvp_forward.1} parent=59 // pred_check
          %p929 = pneg %p330
        $region66: #{realnvp_forward.1} parent=59 // pred_check_branch
          %931 = sbr.rel (%p929) target = $region68
        $region67: #{realnvp_forward.1} parent=59 // pred_region
          %s933 = ssub.s32 128, 128
          %934 = vsyncadd [#allocation3], %s933
          %s935 = smul.addr %s28, 128
          %s936 = scalar_lea.hbm %s10, %s935
          %s938 = sshll.u32 [#allocation2], 4
          %s939 = int_to_ptr.vmem [resolvable:$true] %s938
          %941 = dma.vmem_to_hbm [thread:$0]  %s939, 128, %s936, [#allocation3]
        $region68: #{realnvp_forward.1} parent=59 // pred_fallthru
          _
        // Predicated region
        $region69: #{realnvp_forward.1} parent=59 // pred_check
          %p942 = pneg %p356
        $region70: #{realnvp_forward.1} parent=59 // pred_check_branch
          %944 = sbr.rel (%p942) target = $region72
        $region71: #{realnvp_forward.1} parent=59 // pred_region
          _
        $region72: #{realnvp_forward.1} parent=59 // pred_fallthru
          _
        // Predicated region
        $region73: #{realnvp_forward.1} parent=59 // pred_check
          %p945 = pneg %p330
        $region74: #{realnvp_forward.1} parent=59 // pred_check_branch
          %947 = sbr.rel (%p945) target = $region76
        $region75: #{realnvp_forward.1} parent=59 // pred_region
          %948 = dma.done [#allocation3], 128
        $region76: #{realnvp_forward.1} parent=59 // pred_fallthru
          _
        // Predicated region
        $region77: #{realnvp_forward.1} parent=59 // pred_check
          %p949 = pneg %p356
        $region78: #{realnvp_forward.1} parent=59 // pred_check_branch
          %951 = sbr.rel (%p949) target = $region80
        $region79: #{realnvp_forward.1} parent=59 // pred_region
          %p952 = scmp.lt.s32.totalorder %s28, 0
          %s953 = scalar_select %p952, %s28, 0
          %s954 = smul.addr %s953, 8
          %s955 = scalar_lea.vmem %s11, %s954
        $region80: #{realnvp_forward.1} parent=59 // pred_fallthru
          _
      $region60: #{realnvp_forward.1} parent=5 // pred_fallthru
        _
      %p956 = scmp.le.s32.totalorder 2, %s19
      // Predicated region
      $region81: #{realnvp_forward.1} parent=5 // pred_check
        %p957 = pneg %p956
      $region82: #{realnvp_forward.1} parent=5 // pred_check_branch
        %959 = sbr.rel (%p957) target = $region84
      $region83: #{realnvp_forward.1} parent=5 // pred_region
        %s960 = ssub.s32 %s19, 2
      $region84: #{realnvp_forward.1} parent=5 // pred_fallthru
        _
    $region6: #{realnvp_forward.1} parent=1 // loop_footer
      %s23 = sadd.s32 1, %s19
    $region7: #{realnvp_forward.1} parent=1 // loop_footer_branch
      %18 = sbr.rel target = $region3
    $region8: #{realnvp_forward.1} parent=1 // loop_exit
      _
    %961 = vsyncpa [#allocation3], 1
    %s962 = scalar_lea.sflag [#allocation3], 1
    %963 = vsyncpa %s962, 1

</llo_original>
